<compile_context>
chip_gen: v6e
topology: v6e:2x2x1
jax: 0.10.0
libtpu: 0.0.40
codegen_flags: <defaults>
</compile_context>

<pallas_src>
import math

import jax
import jax.numpy as jnp
from jax.experimental import pallas as pl
from jax.experimental.pallas import tpu as pltpu


_VMEM_TARGET_BYTES = 48 * 1024 * 1024   # stay well under v7x's 64 MiB per-TC VMEM


def _cdiv(a, b):
    return -(-a // b)


def _round_up(x, m):
    return _cdiv(x, m) * m


# ---------------------------------------------------------------------------
# Kernels
# ---------------------------------------------------------------------------

def _ffn_fused_kernel(x_ref, win_ref, bin_ref, wout_ref, bout_ref, o_ref):
    """out = relu(x @ W_in^T + b_in) @ W_out^T + b_out, whole FF axis in one step.

    x_ref    : (tm, Hp)   input dtype (cast to bf16 in-kernel)
    win_ref  : (Hp, FFp)  bf16  pre-transposed W_in  -> standard (M,K)@(K,N)
    bin_ref  : (1, FFp)   f32
    wout_ref : (FFp, Hp)  bf16  pre-transposed W_out
    bout_ref : (1, Hp)    f32
    o_ref    : (tm, Hp)
    """
    x = x_ref[...].astype(jnp.bfloat16)
    h = jnp.dot(x, win_ref[...], preferred_element_type=jnp.float32)
    h = jnp.maximum(h + bin_ref[...], 0.0)
    out = jnp.dot(h.astype(jnp.bfloat16), wout_ref[...],
                  preferred_element_type=jnp.float32)
    o_ref[...] = (out + bout_ref[...]).astype(o_ref.dtype)


def _ffn_streamed_kernel(x_ref, win_ref, bin_ref, wout_ref, bout_ref, o_ref,
                         acc_ref):
    """Same computation with the FF axis streamed along grid axis 1 (arbitrary)."""
    k = pl.program_id(1)

    x = x_ref[...].astype(jnp.bfloat16)
    h = jnp.dot(x, win_ref[...], preferred_element_type=jnp.float32)
    h = jnp.maximum(h + bin_ref[...], 0.0)
    part = jnp.dot(h.astype(jnp.bfloat16), wout_ref[...],
                   preferred_element_type=jnp.float32)

    @pl.when(k == 0)
    def _():                             # direct store: no zero-fill VPU pass
        acc_ref[...] = part

    @pl.when(k != 0)
    def _():
        acc_ref[...] += part

    @pl.when(k == pl.num_programs(1) - 1)
    def _():
        o_ref[...] = (acc_ref[...] + bout_ref[...]).astype(o_ref.dtype)


# ---------------------------------------------------------------------------
# Tiling / VMEM budgeting helpers
# ---------------------------------------------------------------------------

def _fused_vmem_bytes(tm, Hp, FFp, x_bytes, out_bytes):
    weights = 2 * 2 * Hp * FFp * 2                  # W_in + W_out, 2-deep, bf16
    acts = 2 * tm * Hp * (x_bytes + out_bytes)      # x / out tiles, 2-deep
    biases = 2 * 2 * (FFp + Hp) * 4
    h_tmp = tm * FFp * (4 + 2)                      # f32 h + its bf16 cast
    return weights + acts + biases + h_tmp


def _streamed_vmem_bytes(tm, Hp, tff, x_bytes, out_bytes):
    weights = 2 * 2 * Hp * tff * 2
    acts = 2 * tm * Hp * (x_bytes + out_bytes)
    acc = tm * Hp * 4
    biases = 2 * 2 * (tff + Hp) * 4
    h_tmp = tm * tff * (4 + 2)
    return weights + acts + acc + biases + h_tmp


def _pick_row_tile(M, tile_m):
    n = _cdiv(M, tile_m)
    # v7x megacore: prefer an even number of row tiles when there is more than
    # one, so dimension_semantics=("parallel", ...) keeps both TensorCores busy.
    if n > 1 and n % 2 == 1:
        n += 1
    # Minimize row padding; multiples of 16 keep bf16 sublane pairs full.
    return max(16, _round_up(_cdiv(M, n), 16))


# ---------------------------------------------------------------------------
# Wrapper
# ---------------------------------------------------------------------------

def position_wise_feed_forward(h_V, w_in, b_in, w_out, b_out, *,
                               tile_m=None, tile_ff=None, out_dtype=None):
    """h_V: (..., H).  w_in: (FF, H), w_out: (H, FF) in PyTorch nn.Linear layout,
    b_in: (FF,), b_out: (H,).  Returns (..., H) in `out_dtype` (default
    h_V.dtype; pass jnp.bfloat16 to halve output writeback if downstream allows)."""
    H = h_V.shape[-1]
    FF = w_in.shape[0]
    lead = h_V.shape[:-1]
    M = math.prod(lead) if lead else 1
    out_dtype = jnp.dtype(h_V.dtype if out_dtype is None else out_dtype)
    x_bytes = jnp.dtype(h_V.dtype).itemsize
    o_bytes = out_dtype.itemsize

    # Lane-dense padding of the feature axes (exact: zero rows/cols contribute 0,
    # padded output columns are sliced off at the end).
    Hp = _round_up(H, 128)
    FFp0 = _round_up(FF, 128)

    # --- FF-axis mode selection ---------------------------------------------
    if tile_ff is None:
        # Fused (single FF step) whenever the double-buffered bf16 weights leave
        # room for activation tiles inside the v7x-safe VMEM target.
        weights_resident = 2 * 2 * Hp * FFp0 * 2
        if weights_resident <= _VMEM_TARGET_BYTES // 2:
            tff, FFp = FFp0, FFp0
        else:
            tff = min(512, FFp0)
            FFp = _round_up(FF, tff)
    else:
        tff = min(_round_up(tile_ff, 128), FFp0)
        FFp = _round_up(FF, tff)
    use_fused = (tff == FFp)

    # --- Row tile -------------------------------------------------------------
    if tile_m is None:
        # Streamed mode re-DMAs each weight slice once per row tile, so weight
        # arithmetic intensity is tm FLOP/B; 1024 clears the v6e ridge.  Fused
        # mode keeps weights resident, so 512 is plenty.
        tile_m = 512 if use_fused else 1024
    tm = _pick_row_tile(M, tile_m)

    def _need(tm_):
        return (_fused_vmem_bytes(tm_, Hp, FFp, x_bytes, o_bytes) if use_fused
                else _streamed_vmem_bytes(tm_, Hp, tff, x_bytes, o_bytes))

    # Shrink the row tile until the budget fits the v7x-safe target.
    while tm > 16 and _need(tm) > _VMEM_TARGET_BYTES:
        tm = max(16, _round_up(tm // 2, 16))

    Mp = _round_up(M, tm)
    vmem_limit = int(min(max(_need(tm) * 5 // 4 + (1 << 20), 32 << 20), 64 << 20))

    # --- Operand prep ----------------------------------------------------------
    # x stays in its own dtype (cast to bf16 inside the kernel) -> no extra
    # wrapper-side HBM round trip over the activations.
    x = h_V.reshape(M, H)
    if Mp != M or Hp != H:
        x = jnp.pad(x, ((0, Mp - M), (0, Hp - H)))

    # TODO(synk): in a real model, store the weights pre-transposed / pre-padded
    # in bf16 so this per-call pad + cast (an extra HBM round trip) disappears.
    win_t = jnp.pad(w_in.T, ((0, Hp - H), (0, FFp - FF))).astype(jnp.bfloat16)
    wout_t = jnp.pad(w_out.T, ((0, FFp - FF), (0, Hp - H))).astype(jnp.bfloat16)
    bin_p = jnp.pad(b_in, (0, FFp - FF)).astype(jnp.float32).reshape(1, FFp)
    bout_p = jnp.pad(b_out, (0, Hp - H)).astype(jnp.float32).reshape(1, Hp)

    if use_fused:
        out = pl.pallas_call(
            _ffn_fused_kernel,
            out_shape=jax.ShapeDtypeStruct((Mp, Hp), out_dtype),
            grid_spec=pltpu.PrefetchScalarGridSpec(
                num_scalar_prefetch=0,
                grid=(Mp // tm,),
                in_specs=[
                    pl.BlockSpec((tm, Hp), lambda i: (i, 0)),     # x row tile
                    pl.BlockSpec((Hp, FFp), lambda i: (0, 0)),    # W_in^T (resident)
                    pl.BlockSpec((1, FFp), lambda i: (0, 0)),     # b_in
                    pl.BlockSpec((FFp, Hp), lambda i: (0, 0)),    # W_out^T (resident)
                    pl.BlockSpec((1, Hp), lambda i: (0, 0)),      # b_out
                ],
                out_specs=pl.BlockSpec((tm, Hp), lambda i: (i, 0)),
            ),
            compiler_params=pltpu.CompilerParams(
                dimension_semantics=("parallel",),
                vmem_limit_bytes=vmem_limit),
        )(x, win_t, bin_p, wout_t, bout_p)
    else:
        out = pl.pallas_call(
            _ffn_streamed_kernel,
            out_shape=jax.ShapeDtypeStruct((Mp, Hp), out_dtype),
            grid_spec=pltpu.PrefetchScalarGridSpec(
                num_scalar_prefetch=0,
                grid=(Mp // tm, FFp // tff),
                in_specs=[
                    pl.BlockSpec((tm, Hp), lambda i, k: (i, 0)),   # x row tile
                    pl.BlockSpec((Hp, tff), lambda i, k: (0, k)),  # W_in^T slice
                    pl.BlockSpec((1, tff), lambda i, k: (0, k)),   # b_in slice
                    pl.BlockSpec((tff, Hp), lambda i, k: (k, 0)),  # W_out^T slice
                    pl.BlockSpec((1, Hp), lambda i, k: (0, 0)),    # b_out
                ],
                out_specs=pl.BlockSpec((tm, Hp), lambda i, k: (i, 0)),
                scratch_shapes=[pltpu.VMEM((tm, Hp), jnp.float32)],
            ),
            compiler_params=pltpu.CompilerParams(
                dimension_semantics=("parallel", "arbitrary"),
                vmem_limit_bytes=vmem_limit),
        )(x, win_t, bin_p, wout_t, bout_p)

    return out[:M, :H].reshape(*lead, H)


# ---------------------------------------------------------------------------
# Test harness
# ---------------------------------------------------------------------------

def _init_linear(key, out_features, in_features, dtype=jnp.float32):
    """Deterministic init mimicking nn.Linear default (U(-1/sqrt(fan_in), ...))."""
    k_w, k_b = jax.random.split(key)
    bound = 1.0 / math.sqrt(in_features)
    w = jax.random.uniform(k_w, (out_features, in_features), dtype, -bound, bound)
    b = jax.random.uniform(k_b, (out_features,), dtype, -bound, bound)
    return w, b


def _reference(h_V, w_in, b_in, w_out, b_out):
    """Pure-f32 PyTorch-equivalent reference."""
    return jnp.maximum(h_V @ w_in.T + b_in, 0.0) @ w_out.T + b_out


def _reference_bf16(h_V, w_in, b_in, w_out, b_out):
    """Reference emulating the kernel's bf16-operand / f32-accumulate path."""
    x = h_V.astype(jnp.bfloat16).astype(jnp.float32)
    wi = w_in.astype(jnp.bfloat16).astype(jnp.float32)
    wo = w_out.astype(jnp.bfloat16).astype(jnp.float32)
    h = jnp.maximum(x @ wi.T + b_in, 0.0)
    return h.astype(jnp.bfloat16).astype(jnp.float32) @ wo.T + b_out


if __name__ == "__main__":
    key = jax.random.PRNGKey(0)
    k_x, k_in, k_out, k_in2, k_out2 = jax.random.split(key, 5)

    # --- typical MPNN size: fused (single FF step, weights resident) path ----
    num_hidden, num_ff = 32, 64
    B, N = 2, 8
    h_V = jax.random.normal(k_x, (B, N, num_hidden), jnp.float32)
    w_in, b_in = _init_linear(k_in, num_ff, num_hidden)      # (FF, H), (FF,)
    w_out, b_out = _init_linear(k_out, num_hidden, num_ff)   # (H, FF), (H,)

    out = position_wise_feed_forward(h_V, w_in, b_in, w_out, b_out)
    out = jax.block_until_ready(out)
    assert out.shape == h_V.shape and out.dtype == h_V.dtype
    assert jnp.allclose(out, _reference_bf16(h_V, w_in, b_in, w_out, b_out),
                        atol=2e-3, rtol=2e-3)
    assert jnp.allclose(out, _reference(h_V, w_in, b_in, w_out, b_out),
                        atol=5e-2, rtol=5e-2)

    # --- also exercise the streamed (FF-tiled, accumulator) fallback path ----
    num_ff2 = 256
    w_in2, b_in2 = _init_linear(k_in2, num_ff2, num_hidden)
    w_out2, b_out2 = _init_linear(k_out2, num_hidden, num_ff2)
    out2 = position_wise_feed_forward(h_V, w_in2, b_in2, w_out2, b_out2,
                                      tile_ff=128)            # 2 FF steps
    out2 = jax.block_until_ready(out2)
    assert out2.shape == h_V.shape
    assert jnp.allclose(out2, _reference_bf16(h_V, w_in2, b_in2, w_out2, b_out2),
                        atol=2e-3, rtol=2e-3)
    assert jnp.allclose(out2, _reference(h_V, w_in2, b_in2, w_out2, b_out2),
                        atol=5e-2, rtol=5e-2)

    print("KERNEL_OK")
</pallas_src>

<mosaic_0001>
module attributes {stable_mosaic.version = 11 : i64} {
  func.func @_ffn_fused_kernel(%arg0: i32, %arg1: memref<16x128xf32, #tpu.memory_space<vmem>>, %arg2: memref<128x128xbf16, #tpu.memory_space<vmem>>, %arg3: memref<1x128xf32, #tpu.memory_space<vmem>>, %arg4: memref<128x128xbf16, #tpu.memory_space<vmem>>, %arg5: memref<1x128xf32, #tpu.memory_space<vmem>>, %arg6: memref<16x128xf32, #tpu.memory_space<vmem>>) attributes {dimension_semantics = [#tpu.dimension_semantics<parallel>], iteration_bounds = array<i64: 1>, scalar_prefetch = 0 : i64, scratch_operands = 0 : i64, tpu.core_type = #tpu.core_type<tc>, window_params = [{transform_indices = @transform_0, window_bounds = array<i64: 16, 128>}, {pipeline_mode = #tpu.pipeline_mode<synchronous>, transform_indices = @transform_1, window_bounds = array<i64: 128, 128>}, {pipeline_mode = #tpu.pipeline_mode<synchronous>, transform_indices = @transform_2, window_bounds = array<i64: 1, 128>}, {pipeline_mode = #tpu.pipeline_mode<synchronous>, transform_indices = @transform_3, window_bounds = array<i64: 128, 128>}, {pipeline_mode = #tpu.pipeline_mode<synchronous>, transform_indices = @transform_4, window_bounds = array<i64: 1, 128>}, {transform_indices = @transform_5, window_bounds = array<i64: 16, 128>}]} {
    %c0 = arith.constant 0 : index
    %c0_0 = arith.constant 0 : index
    %0 = vector.load %arg1[%c0, %c0_0] : memref<16x128xf32, #tpu.memory_space<vmem>>, vector<16x128xf32>
    %1 = arith.truncf %0 : vector<16x128xf32> to vector<16x128xbf16>
    %c0_1 = arith.constant 0 : index
    %c0_2 = arith.constant 0 : index
    %2 = vector.load %arg2[%c0_1, %c0_2] : memref<128x128xbf16, #tpu.memory_space<vmem>>, vector<128x128xbf16>
    %cst = arith.constant dense<0.000000e+00> : vector<16x128xf32>
    %3 = tpu.matmul %1, %2, %cst {dimension_numbers = #tpu.dot_dimension_numbers<[1], [0], [0], [1], [0, 0, 1, 1], [], []>} : vector<16x128xbf16>, vector<128x128xbf16>, vector<16x128xf32> -> vector<16x128xf32>
    %c0_3 = arith.constant 0 : index
    %c0_4 = arith.constant 0 : index
    %4 = vector.load %arg3[%c0_3, %c0_4] : memref<1x128xf32, #tpu.memory_space<vmem>>, vector<1x128xf32>
    %5 = vector.broadcast %4 : vector<1x128xf32> to vector<16x128xf32>
    %6 = arith.addf %3, %5 : vector<16x128xf32>
    %cst_5 = arith.constant 0.000000e+00 : f32
    %7 = vector.broadcast %cst_5 : f32 to vector<16x128xf32>
    %8 = arith.maximumf %6, %7 : vector<16x128xf32>
    %9 = arith.truncf %8 : vector<16x128xf32> to vector<16x128xbf16>
    %c0_6 = arith.constant 0 : index
    %c0_7 = arith.constant 0 : index
    %10 = vector.load %arg4[%c0_6, %c0_7] : memref<128x128xbf16, #tpu.memory_space<vmem>>, vector<128x128xbf16>
    %cst_8 = arith.constant dense<0.000000e+00> : vector<16x128xf32>
    %11 = tpu.matmul %9, %10, %cst_8 {dimension_numbers = #tpu.dot_dimension_numbers<[1], [0], [0], [1], [0, 0, 1, 1], [], []>} : vector<16x128xbf16>, vector<128x128xbf16>, vector<16x128xf32> -> vector<16x128xf32>
    %c0_9 = arith.constant 0 : index
    %c0_10 = arith.constant 0 : index
    %12 = vector.load %arg5[%c0_9, %c0_10] : memref<1x128xf32, #tpu.memory_space<vmem>>, vector<1x128xf32>
    %13 = vector.broadcast %12 : vector<1x128xf32> to vector<16x128xf32>
    %14 = arith.addf %11, %13 : vector<16x128xf32>
    %c0_11 = arith.constant 0 : index
    %c0_12 = arith.constant 0 : index
    %15 = vector.load %arg6[%c0_11, %c0_12] : memref<16x128xf32, #tpu.memory_space<vmem>>, vector<16x128xf32>
    tpu.vector_store %arg6[%c0_11, %c0_12], %14 {strides = array<i32>} : memref<16x128xf32, #tpu.memory_space<vmem>>, vector<16x128xf32>,
    return
  }
  func.func @transform_0(%arg0: i32) -> (i32, i32) {
    %c0_i32 = arith.constant 0 : i32
    %c0_i32_0 = arith.constant 0 : i32
    return %arg0, %c0_i32 : i32, i32
  }
  func.func @transform_1(%arg0: i32) -> (i32, i32) {
    %c0_i32 = arith.constant 0 : i32
    %c0_i32_0 = arith.constant 0 : i32
    %c0_i32_1 = arith.constant 0 : i32
    return %c0_i32, %c0_i32_0 : i32, i32
  }
  func.func @transform_2(%arg0: i32) -> (i32, i32) {
    %c0_i32 = arith.constant 0 : i32
    %c0_i32_0 = arith.constant 0 : i32
    %c0_i32_1 = arith.constant 0 : i32
    return %c0_i32, %c0_i32_0 : i32, i32
  }
  func.func @transform_3(%arg0: i32) -> (i32, i32) {
    %c0_i32 = arith.constant 0 : i32
    %c0_i32_0 = arith.constant 0 : i32
    %c0_i32_1 = arith.constant 0 : i32
    return %c0_i32, %c0_i32_0 : i32, i32
  }
  func.func @transform_4(%arg0: i32) -> (i32, i32) {
    %c0_i32 = arith.constant 0 : i32
    %c0_i32_0 = arith.constant 0 : i32
    %c0_i32_1 = arith.constant 0 : i32
    return %c0_i32, %c0_i32_0 : i32, i32
  }
  func.func @transform_5(%arg0: i32) -> (i32, i32) {
    %c0_i32 = arith.constant 0 : i32
    %c0_i32_0 = arith.constant 0 : i32
    return %arg0, %c0_i32 : i32, i32
  }
}

</mosaic_0001>

<llo_original>
// kernel: tpu_custom_call.1
$region0: #{tpu_custom_call.1}
  #allocation0 [shape = 'u32[]', space=smem, size = 0x4, offset = 0x4, fixed_abs, tag = 'smem constant byte address 0x4 - core index']
  #allocation1 [shape = 'u32[144,128]{1,0:T(1,128)}', space=vmem, size = 0x12000, scoped, tag = 'internal scratch']
  %s0 = inlined_call_operand.hbm [shape: f32[16,128], index: 0, kind: input, shape index: {}]
  %s1 = inlined_call_operand.hbm [shape: bf16[128,128], index: 1, kind: input, shape index: {}]
  %s2 = inlined_call_operand.vmem [shape: f32[1,128], index: 2, kind: input, shape index: {}]
  %s3 = inlined_call_operand.hbm [shape: bf16[128,128], index: 3, kind: input, shape index: {}]
  %s4 = inlined_call_operand.vmem [shape: f32[1,128], index: 4, kind: input, shape index: {}]
  %s5 = inlined_call_operand.hbm [shape: f32[16,128], index: 5, kind: output, shape index: {}]
  %s6 = sld [smem:[#allocation0]]
  $region42: #{tpu_custom_call.1} parent=0
    _
  %s8 = ssub.s32 1, %s6
  %s9 = scalar_select 0, %s8, %s6
  $region1: #{tpu_custom_call.1} parent=0
    #allocation2 [shape = 'u8[8192]{0}', space=vmem, size = 0x2000, scoped, tag = 'input window, operand 0, single buffered']
    #allocation3 [shape = 's32[1]{0}', space=sflag, size = 0x4, scoped, tag = 'scoped memory for tpu_custom_call.1']
    #allocation4 [shape = 's32[1]{0}', space=sflag, size = 0x4, scoped, tag = 'scoped memory for tpu_custom_call.1']
    #allocation5 [shape = 'u8[32768]{0}', space=vmem, size = 0x8000, scoped, tag = 'input window, operand 1, single buffered']
    #allocation6 [shape = 's32[1]{0}', space=sflag, size = 0x4, scoped, tag = 'scoped memory for tpu_custom_call.1']
    #allocation7 [shape = 'u8[32768]{0}', space=vmem, size = 0x8000, scoped, tag = 'input window, operand 3, single buffered']
    #allocation8 [shape = 'u8[8192]{0}', space=vmem, size = 0x2000, scoped, tag = 'output window, operand 0, single buffered']
    %10 = vsyncpa [#allocation3], 0
    %11 = vsyncpa [#allocation6], 0
    %12 = vsyncpa [#allocation4], 0
    // Predicated region
    $region2: #{tpu_custom_call.1} parent=1 // pred_check
      _
    $region3: #{tpu_custom_call.1} parent=1 // pred_check_branch
      %14 = sbr.rel (0) target = $region5
    $region4: #{tpu_custom_call.1} parent=1 // pred_region
      %s16 = ssub.s32 256, 256
      %17 = vsyncadd [#allocation3], %s16
      %s18 = sshll.u32 [#allocation2], 4
      %s19 = int_to_ptr.vmem [resolvable:$true] %s18
      %24 = dma.hbm_to_vmem [thread:$0]  %s0, 256, %s19, [#allocation3], 128, 128, 8
    $region5: #{tpu_custom_call.1} parent=1 // pred_fallthru
      _
    // Predicated region
    $region6: #{tpu_custom_call.1} parent=1 // pred_check
      _
    $region7: #{tpu_custom_call.1} parent=1 // pred_check_branch
      %26 = sbr.rel (0) target = $region9
    $region8: #{tpu_custom_call.1} parent=1 // pred_region
      %s28 = ssub.s32 1024, 1024
      %29 = vsyncadd [#allocation6], %s28
      %s30 = sshll.u32 [#allocation5], 4
      %s31 = int_to_ptr.vmem [resolvable:$true] %s30
      %36 = dma.hbm_to_vmem [thread:$0]  %s1, 1024, %s31, [#allocation6], 64, 64, 4
    $region9: #{tpu_custom_call.1} parent=1 // pred_fallthru
      _
    // Predicated region
    $region10: #{tpu_custom_call.1} parent=1 // pred_check
      _
    $region11: #{tpu_custom_call.1} parent=1 // pred_check_branch
      %38 = sbr.rel (0) target = $region13
    $region12: #{tpu_custom_call.1} parent=1 // pred_region
      _
    $region13: #{tpu_custom_call.1} parent=1 // pred_fallthru
      _
    // Predicated region
    $region14: #{tpu_custom_call.1} parent=1 // pred_check
      _
    $region15: #{tpu_custom_call.1} parent=1 // pred_check_branch
      %40 = sbr.rel (0) target = $region17
    $region16: #{tpu_custom_call.1} parent=1 // pred_region
      %s42 = ssub.s32 1024, 1024
      %43 = vsyncadd [#allocation6], %s42
      %s44 = sshll.u32 [#allocation7], 4
      %s45 = int_to_ptr.vmem [resolvable:$true] %s44
      %50 = dma.hbm_to_vmem [thread:$0]  %s3, 1024, %s45, [#allocation6], 64, 64, 4
    $region17: #{tpu_custom_call.1} parent=1 // pred_fallthru
      _
    // Predicated region
    $region18: #{tpu_custom_call.1} parent=1 // pred_check
      _
    $region19: #{tpu_custom_call.1} parent=1 // pred_check_branch
      %52 = sbr.rel (0) target = $region21
    $region20: #{tpu_custom_call.1} parent=1 // pred_region
      _
    $region21: #{tpu_custom_call.1} parent=1 // pred_fallthru
      _
    // Predicated region
    $region22: #{tpu_custom_call.1} parent=1 // pred_check
      _
    $region23: #{tpu_custom_call.1} parent=1 // pred_check_branch
      %54 = sbr.rel (0) target = $region25
    $region24: #{tpu_custom_call.1} parent=1 // pred_region
      %55 = dma.done [#allocation3], 256
    $region25: #{tpu_custom_call.1} parent=1 // pred_fallthru
      _
    // Predicated region
    $region26: #{tpu_custom_call.1} parent=1 // pred_check
      _
    $region27: #{tpu_custom_call.1} parent=1 // pred_check_branch
      %57 = sbr.rel (0) target = $region29
    $region28: #{tpu_custom_call.1} parent=1 // pred_region
      %58 = dma.done [#allocation6], 1024
    $region29: #{tpu_custom_call.1} parent=1 // pred_fallthru
      _
    // Predicated region
    $region30: #{tpu_custom_call.1} parent=1 // pred_check
      _
    $region31: #{tpu_custom_call.1} parent=1 // pred_check_branch
      %60 = sbr.rel (0) target = $region33
    $region32: #{tpu_custom_call.1} parent=1 // pred_region
      %61 = dma.done [#allocation6], 1024
    $region33: #{tpu_custom_call.1} parent=1 // pred_fallthru
      _
    %v63 = vld [vmem:[#allocation2] sm:$0xff]
    %v64 = vld [vmem:[#allocation2 + $0x8] sm:$0xff]
    %v65 = vpack.c.bf16 %v64, %v63
    %v66 = vld [vmem:[#allocation5] sm:$0xf]
    %v67 = vld [vmem:[#allocation5 + $0x4] sm:$0xf]
    %v68 = vld [vmem:[#allocation5 + $0x8] sm:$0xf]
    %v69 = vld [vmem:[#allocation5 + $0xc] sm:$0xf]
    %v70 = vld [vmem:[#allocation5 + $0x10] sm:$0xf]
    %v71 = vld [vmem:[#allocation5 + $0x14] sm:$0xf]
    %v72 = vld [vmem:[#allocation5 + $0x18] sm:$0xf]
    %v73 = vld [vmem:[#allocation5 + $0x1c] sm:$0xf]
    %v74 = vld [vmem:[#allocation5 + $0x20] sm:$0xf]
    %v75 = vld [vmem:[#allocation5 + $0x24] sm:$0xf]
    %v76 = vld [vmem:[#allocation5 + $0x28] sm:$0xf]
    %v77 = vld [vmem:[#allocation5 + $0x2c] sm:$0xf]
    %v78 = vld [vmem:[#allocation5 + $0x30] sm:$0xf]
    %v79 = vld [vmem:[#allocation5 + $0x34] sm:$0xf]
    %v80 = vld [vmem:[#allocation5 + $0x38] sm:$0xf]
    %v81 = vld [vmem:[#allocation5 + $0x3c] sm:$0xf]
    %v82 = vld [vmem:[%s2] sm:$0x1]
    %v84 = vlaneseq
    %v85 = vshrl.u32 %v84, 7
    %v86 = vsub.s32 0, %v85
    %v87 = vrot.slane %v82, %v86
    %v105 = vunpack.c.l.b16 %v66
    %v106 = vunpack.c.l.b16 %v67
    %v107 = vunpack.c.l.b16 %v68
    %v108 = vunpack.c.l.b16 %v69
    %v109 = vunpack.c.l.b16 %v70
    %v110 = vunpack.c.l.b16 %v71
    %v111 = vunpack.c.l.b16 %v72
    %v112 = vunpack.c.l.b16 %v73
    %v113 = vunpack.c.l.b16 %v74
    %v114 = vunpack.c.l.b16 %v75
    %v115 = vunpack.c.l.b16 %v76
    %v116 = vunpack.c.l.b16 %v77
    %v117 = vunpack.c.l.b16 %v78
    %v118 = vunpack.c.l.b16 %v79
    %v119 = vunpack.c.l.b16 %v80
    %v120 = vunpack.c.l.b16 %v81
    %v121 = vpack.c.b16 %v106, %v105
    %v122 = vpack.c.b16 %v108, %v107
    %v123 = vpack.c.b16 %v110, %v109
    %v124 = vpack.c.b16 %v112, %v111
    %v125 = vpack.c.b16 %v114, %v113
    %v126 = vpack.c.b16 %v116, %v115
    %v127 = vpack.c.b16 %v118, %v117
    %v128 = vpack.c.b16 %v120, %v119
    %137 = vmatprep.subr.bf16.mxu0 0
    %138 = vmatpush1.bf16.msra.mxu0 %v128
    %139 = vmatprep.subr.bf16.mxu0 0
    %140 = vmatpush1.bf16.msra.mxu0 %v127
    %141 = vmatprep.subr.bf16.mxu0 0
    %142 = vmatpush1.bf16.msra.mxu0 %v126
    %143 = vmatprep.subr.bf16.mxu0 0
    %144 = vmatpush1.bf16.msra.mxu0 %v125
    %145 = vmatprep.subr.bf16.mxu0 0
    %146 = vmatpush1.bf16.msra.mxu0 %v124
    %147 = vmatprep.subr.bf16.mxu0 0
    %148 = vmatpush1.bf16.msra.mxu0 %v123
    %149 = vmatprep.subr.bf16.mxu0 0
    %150 = vmatpush1.bf16.msra.mxu0 %v122
    %151 = vmatprep.subr.bf16.mxu0 0
    %152 = vmatpush1.bf16.msra.mxu0 %v121
    %153 = vmatprep.subr.bf16.mxu0 0
    %154 = vmatpush2.bf16.msra.mxu0 0
    %155 = vmatprep.subr.bf16.mxu0 0
    %156 = vmatpush2.bf16.msra.mxu0 0
    %157 = vmatprep.subr.bf16.mxu0 0
    %158 = vmatpush2.bf16.msra.mxu0 0
    %159 = vmatprep.subr.bf16.mxu0 0
    %160 = vmatpush2.bf16.msra.mxu0 0
    %161 = vmatprep.subr.bf16.mxu0 0
    %162 = vmatpush2.bf16.msra.mxu0 0
    %163 = vmatprep.subr.bf16.mxu0 0
    %164 = vmatpush2.bf16.msra.mxu0 0
    %165 = vmatprep.subr.bf16.mxu0 0
    %166 = vmatpush2.bf16.msra.mxu0 0
    %167 = vmatprep.subr.bf16.mxu0 0
    %168 = vmatpush2.bf16.msra.mxu0 0
    %169 = vmatprep.mubr.bf16.mxu0 0
    %170 = vmatmul.mubr.bf16.gmra.mxu0 %v65
    %v171 = vpop.f32.mrf.mxu0
    %v172 = vadd.f32 %v87, %v171
    %v173 = vpop.f32.mrf.mxu0
    %v174 = vpop.f32.mrf.mxu0
    %v175 = vadd.f32 %v87, %v174
    %v176 = vpop.f32.mrf.mxu0
    %177 = vdwg.mxu0
    %v178 = vmax.f32 %v172, 0.0
    %v179 = vmax.f32 %v175, 0.0
    %v180 = vpack.c.bf16 %v179, %v178
    %v181 = vld [vmem:[#allocation7] sm:$0xf]
    %v182 = vld [vmem:[#allocation7 + $0x4] sm:$0xf]
    %v183 = vld [vmem:[#allocation7 + $0x8] sm:$0xf]
    %v184 = vld [vmem:[#allocation7 + $0xc] sm:$0xf]
    %v185 = vld [vmem:[#allocation7 + $0x10] sm:$0xf]
    %v186 = vld [vmem:[#allocation7 + $0x14] sm:$0xf]
    %v187 = vld [vmem:[#allocation7 + $0x18] sm:$0xf]
    %v188 = vld [vmem:[#allocation7 + $0x1c] sm:$0xf]
    %v189 = vld [vmem:[#allocation7 + $0x20] sm:$0xf]
    %v190 = vld [vmem:[#allocation7 + $0x24] sm:$0xf]
    %v191 = vld [vmem:[#allocation7 + $0x28] sm:$0xf]
    %v192 = vld [vmem:[#allocation7 + $0x2c] sm:$0xf]
    %v193 = vld [vmem:[#allocation7 + $0x30] sm:$0xf]
    %v194 = vld [vmem:[#allocation7 + $0x34] sm:$0xf]
    %v195 = vld [vmem:[#allocation7 + $0x38] sm:$0xf]
    %v196 = vld [vmem:[#allocation7 + $0x3c] sm:$0xf]
    %v197 = vld [vmem:[%s4] sm:$0x1]
    %v199 = vlaneseq
    %v200 = vshrl.u32 %v199, 7
    %v201 = vsub.s32 0, %v200
    %v202 = vrot.slane %v197, %v201
    %v220 = vunpack.c.l.b16 %v181
    %v221 = vunpack.c.l.b16 %v182
    %v222 = vunpack.c.l.b16 %v183
    %v223 = vunpack.c.l.b16 %v184
    %v224 = vunpack.c.l.b16 %v185
    %v225 = vunpack.c.l.b16 %v186
    %v226 = vunpack.c.l.b16 %v187
    %v227 = vunpack.c.l.b16 %v188
    %v228 = vunpack.c.l.b16 %v189
    %v229 = vunpack.c.l.b16 %v190
    %v230 = vunpack.c.l.b16 %v191
    %v231 = vunpack.c.l.b16 %v192
    %v232 = vunpack.c.l.b16 %v193
    %v233 = vunpack.c.l.b16 %v194
    %v234 = vunpack.c.l.b16 %v195
    %v235 = vunpack.c.l.b16 %v196
    %v236 = vpack.c.b16 %v221, %v220
    %v237 = vpack.c.b16 %v223, %v222
    %v238 = vpack.c.b16 %v225, %v224
    %v239 = vpack.c.b16 %v227, %v226
    %v240 = vpack.c.b16 %v229, %v228
    %v241 = vpack.c.b16 %v231, %v230
    %v242 = vpack.c.b16 %v233, %v232
    %v243 = vpack.c.b16 %v235, %v234
    %252 = vmatprep.subr.bf16.mxu0 0
    %253 = vmatpush1.bf16.msra.mxu0 %v243
    %254 = vmatprep.subr.bf16.mxu0 0
    %255 = vmatpush1.bf16.msra.mxu0 %v242
    %256 = vmatprep.subr.bf16.mxu0 0
    %257 = vmatpush1.bf16.msra.mxu0 %v241
    %258 = vmatprep.subr.bf16.mxu0 0
    %259 = vmatpush1.bf16.msra.mxu0 %v240
    %260 = vmatprep.subr.bf16.mxu0 0
    %261 = vmatpush1.bf16.msra.mxu0 %v239
    %262 = vmatprep.subr.bf16.mxu0 0
    %263 = vmatpush1.bf16.msra.mxu0 %v238
    %264 = vmatprep.subr.bf16.mxu0 0
    %265 = vmatpush1.bf16.msra.mxu0 %v237
    %266 = vmatprep.subr.bf16.mxu0 0
    %267 = vmatpush1.bf16.msra.mxu0 %v236
    %268 = vmatprep.subr.bf16.mxu0 0
    %269 = vmatpush2.bf16.msra.mxu0 0
    %270 = vmatprep.subr.bf16.mxu0 0
    %271 = vmatpush2.bf16.msra.mxu0 0
    %272 = vmatprep.subr.bf16.mxu0 0
    %273 = vmatpush2.bf16.msra.mxu0 0
    %274 = vmatprep.subr.bf16.mxu0 0
    %275 = vmatpush2.bf16.msra.mxu0 0
    %276 = vmatprep.subr.bf16.mxu0 0
    %277 = vmatpush2.bf16.msra.mxu0 0
    %278 = vmatprep.subr.bf16.mxu0 0
    %279 = vmatpush2.bf16.msra.mxu0 0
    %280 = vmatprep.subr.bf16.mxu0 0
    %281 = vmatpush2.bf16.msra.mxu0 0
    %282 = vmatprep.subr.bf16.mxu0 0
    %283 = vmatpush2.bf16.msra.mxu0 0
    %284 = vmatprep.mubr.bf16.mxu0 0
    %285 = vmatmul.mubr.bf16.gmra.mxu0 %v180
    %v286 = vpop.f32.mrf.mxu0
    %v287 = vadd.f32 %v202, %v286
    %v288 = vpop.f32.mrf.mxu0
    %v289 = vpop.f32.mrf.mxu0
    %v290 = vadd.f32 %v202, %v289
    %v291 = vpop.f32.mrf.mxu0
    %292 = vdwg.mxu0
    %293 = vst [vmem:[#allocation8] sm:$0xff] %v287
    %294 = vst [vmem:[#allocation8 + $0x8] sm:$0xff] %v290
    // Predicated region
    $region34: #{tpu_custom_call.1} parent=1 // pred_check
      _
    $region35: #{tpu_custom_call.1} parent=1 // pred_check_branch
      %296 = sbr.rel (0) target = $region37
    $region36: #{tpu_custom_call.1} parent=1 // pred_region
      %s298 = ssub.s32 256, 256
      %299 = vsyncadd [#allocation4], %s298
      %s300 = sshll.u32 [#allocation8], 4
      %s301 = int_to_ptr.vmem [resolvable:$true] %s300
      %306 = dma.vmem_to_hbm [thread:$0]  %s301, 256, %s5, [#allocation4], 128, 128, 8
    $region37: #{tpu_custom_call.1} parent=1 // pred_fallthru
      _
    // Predicated region
    $region38: #{tpu_custom_call.1} parent=1 // pred_check
      _
    $region39: #{tpu_custom_call.1} parent=1 // pred_check_branch
      %308 = sbr.rel (0) target = $region41
    $region40: #{tpu_custom_call.1} parent=1 // pred_region
      %309 = dma.done [#allocation4], 256
    $region41: #{tpu_custom_call.1} parent=1 // pred_fallthru
      _
    %310 = vsyncpa [#allocation3], 1
    %311 = vsyncpa [#allocation6], 1
    %312 = vsyncpa [#allocation4], 1

</llo_original>
